<compile_context>
chip_gen: v7x
topology: tpu7x:2x2x1
jax: 0.10.0
libtpu: 0.0.40
codegen_flags: <defaults>
</compile_context>

<pallas_src>
import functools

import jax
import jax.numpy as jnp
from jax.experimental import pallas as pl
from jax.experimental.pallas import tpu as pltpu

_H1_REAL = 64   # true layer-1 width (matches PyTorch NNet)
_H1_PAD = 128   # zero-padded width -> lane-dense h1 (extra cols/rows are exact zeros)
_H2 = 128       # layer-2 width


def _cdiv(a: int, b: int) -> int:
    return -(-a // b)


def _round_up(x: int, m: int) -> int:
    return _cdiv(x, m) * m


def mlp_kernel(x_ref, w1_ref, b1_ref, w2_ref, b2_ref, w3_ref, b3_ref, o_ref):
    # x arrives in its native (f32) dtype straight from HBM; cast to bf16 here so the
    # wrapper never does a separate cast pass over the whole batch.
    x = x_ref[...].astype(jnp.bfloat16)
    # Layer 1: Linear(input_size, 64) + ReLU (zero-padded to 128 lanes, f32 accumulate)
    h1 = jnp.dot(x, w1_ref[...], preferred_element_type=jnp.float32)
    h1 = jnp.maximum(h1 + b1_ref[...], 0.0)
    # Layer 2: Linear(64, 128) + ReLU (padded w2 rows are zero -> math unchanged)
    h2 = jnp.dot(h1.astype(jnp.bfloat16), w2_ref[...],
                 preferred_element_type=jnp.float32)
    h2 = jnp.maximum(h2 + b2_ref[...], 0.0)
    # Layer 3: Linear(128, action_dim * feature_dim), no activation
    out = jnp.dot(h2.astype(jnp.bfloat16), w3_ref[...],
                  preferred_element_type=jnp.float32)
    o_ref[...] = (out + b3_ref[...]).astype(o_ref.dtype)


def prepare_params(params):
    """One-time conversion of NNet params to kernel-ready dtypes/layouts.

    Call once (e.g. at model build time), NOT per forward call:
      * weights -> bf16 MXU operands
      * biases  -> f32 row vectors (bias-add / ReLU stay f32)
      * layer-1 zero-padded 64 -> 128 so h1 occupies all 128 vreg lanes
    """
    w1, b1, w2, b2, w3, b3 = params
    w1 = w1.astype(jnp.bfloat16)
    w2 = w2.astype(jnp.bfloat16)
    w3 = w3.astype(jnp.bfloat16)
    b1 = b1.reshape(1, -1).astype(jnp.float32)
    b2 = b2.reshape(1, -1).astype(jnp.float32)
    b3 = b3.reshape(1, -1).astype(jnp.float32)

    w1p = jnp.zeros((w1.shape[0], _H1_PAD), jnp.bfloat16).at[:, :_H1_REAL].set(w1)
    b1p = jnp.zeros((1, _H1_PAD), jnp.float32).at[:, :_H1_REAL].set(b1)
    w2p = jnp.zeros((_H1_PAD, _H2), jnp.bfloat16).at[:_H1_REAL, :].set(w2)
    return (w1p, b1p, w2p, b2, w3, b3)


@functools.partial(jax.jit, static_argnums=(2, 3, 4, 5, 6, 7))
def nnet_forward(x, prepared_params, input_size, action_dim, feature_dim,
                 block_batch=8192, min_blocks=2, out_dtype=jnp.float32):
    """NNet forward. x: any shape flattening to (-1, input_size).

    prepared_params must come from prepare_params() (converted once, outside the
    hot path). Returns (batch, action_dim, feature_dim) in out_dtype.
    """
    w1, b1, w2, b2, w3, b3 = prepared_params
    out_dim = action_dim * feature_dim

    x2d = x.reshape(-1, input_size)
    if not jnp.issubdtype(x2d.dtype, jnp.floating):
        x2d = x2d.astype(jnp.float32)   # mirrors PyTorch's .float() for int inputs
    batch = x2d.shape[0]

    # ---- batch tiling -------------------------------------------------------
    # n_blocks: just enough to cap the tile at block_batch, bumped to a multiple
    # of min_blocks (>=2) when the batch allows so v7x's two TensorCores both get
    # work. Tile = round_up(cdiv(batch, n_blocks), 128) keeps padding waste small.
    rounded = _round_up(batch, 128)
    n_blocks = _cdiv(rounded, block_batch)
    if min_blocks > 1 and rounded >= min_blocks * 128:
        n_blocks = _round_up(max(n_blocks, min_blocks), min_blocks)
    tb = _round_up(_cdiv(batch, n_blocks), 128)
    padded = tb * n_blocks
    if padded != batch:
        # Pad the native-dtype array (no extra f32 copy pass).
        x2d = jnp.pad(x2d, ((0, padded - batch), (0, 0)))

    resident = lambda i: (0, 0)  # constant block index -> stays in VMEM, DMA'd once

    grid_spec = pltpu.PrefetchScalarGridSpec(
        num_scalar_prefetch=0,
        grid=(n_blocks,),
        in_specs=[
            pl.BlockSpec((tb, input_size), lambda i: (i, 0)),  # x tile (pipelined)
            pl.BlockSpec(w1.shape, resident),
            pl.BlockSpec(b1.shape, resident),
            pl.BlockSpec(w2.shape, resident),
            pl.BlockSpec(b2.shape, resident),
            pl.BlockSpec(w3.shape, resident),
            pl.BlockSpec(b3.shape, resident),
        ],
        out_specs=pl.BlockSpec((tb, out_dim), lambda i: (i, 0)),
    )

    flops = 2 * padded * (input_size * _H1_PAD + _H1_PAD * _H2 + _H2 * out_dim)
    bytes_accessed = (
        padded * input_size * x2d.dtype.itemsize
        + sum(a.size * a.dtype.itemsize for a in (w1, b1, w2, b2, w3, b3))
        + padded * out_dim * jnp.dtype(out_dtype).itemsize
    )

    out2d = pl.pallas_call(
        mlp_kernel,
        out_shape=jax.ShapeDtypeStruct((padded, out_dim), jnp.dtype(out_dtype)),
        grid_spec=grid_spec,
        compiler_params=pltpu.CompilerParams(
            dimension_semantics=("parallel",),   # megacore / v7x 2-TC sharding
            vmem_limit_bytes=32 << 20,           # room for tb=8192 tiles on v5e too
        ),
        cost_estimate=pl.CostEstimate(
            flops=flops, transcendentals=0, bytes_accessed=bytes_accessed
        ),
    )(x2d, w1, b1, w2, b2, w3, b3)

    if padded != batch:
        out2d = out2d[:batch]
    return out2d.reshape(batch, action_dim, feature_dim)


def init_params(key, input_size, action_dim, feature_dim):
    """Deterministic PyTorch-style (uniform +/- 1/sqrt(fan_in)) initialization."""
    dims = [(input_size, 64), (64, 128), (128, action_dim * feature_dim)]
    params = []
    for fan_in, fan_out in dims:
        key, kw, kb = jax.random.split(key, 3)
        bound = 1.0 / jnp.sqrt(float(fan_in))
        w = jax.random.uniform(kw, (fan_in, fan_out), jnp.float32, -bound, bound)
        b = jax.random.uniform(kb, (1, fan_out), jnp.float32, -bound, bound)
        params.extend([w, b])
    return tuple(params)


def nnet_reference(x, params, input_size, action_dim, feature_dim):
    """Pure-JAX reference mirroring the kernel's bf16-operand / f32-accumulate math."""
    w1, b1, w2, b2, w3, b3 = params
    bf = lambda a: a.astype(jnp.bfloat16).astype(jnp.float32)
    h = x.reshape(-1, input_size).astype(jnp.float32)
    h = jnp.maximum(bf(h) @ bf(w1) + b1, 0.0)
    h = jnp.maximum(bf(h) @ bf(w2) + b2, 0.0)
    h = bf(h) @ bf(w3) + b3
    return h.reshape(h.shape[0], action_dim, feature_dim)


if __name__ == "__main__":
    input_size = 32
    action_dim = 4
    feature_dim = 8
    batch = 8

    key = jax.random.PRNGKey(0)
    key, kx = jax.random.split(key)
    x = jax.random.normal(kx, (batch, input_size), jnp.float32)

    params = init_params(key, input_size, action_dim, feature_dim)
    prepared = prepare_params(params)   # one-time weight/bias conversion

    out = nnet_forward(x, prepared, input_size, action_dim, feature_dim)
    out = jax.block_until_ready(out)

    ref = nnet_reference(x, params, input_size, action_dim, feature_dim)
    assert out.shape == (batch, action_dim, feature_dim), out.shape
    assert jnp.allclose(out, ref, atol=1e-3, rtol=1e-3), "mismatch vs reference"

    print("KERNEL_OK")
</pallas_src>

<mosaic_0001>
module attributes {stable_mosaic.version = 11 : i64} {
  func.func @mlp_kernel(%arg0: i32, %arg1: memref<128x32xf32, #tpu.memory_space<vmem>>, %arg2: memref<32x128xbf16, #tpu.memory_space<vmem>>, %arg3: memref<1x128xf32, #tpu.memory_space<vmem>>, %arg4: memref<128x128xbf16, #tpu.memory_space<vmem>>, %arg5: memref<1x128xf32, #tpu.memory_space<vmem>>, %arg6: memref<128x32xbf16, #tpu.memory_space<vmem>>, %arg7: memref<1x32xf32, #tpu.memory_space<vmem>>, %arg8: memref<128x32xf32, #tpu.memory_space<vmem>>) attributes {dimension_semantics = [#tpu.dimension_semantics<parallel>], iteration_bounds = array<i64: 1>, scalar_prefetch = 0 : i64, scratch_operands = 0 : i64, tpu.core_type = #tpu.core_type<tc>, window_params = [{transform_indices = @transform_0, window_bounds = array<i64: 128, 32>}, {pipeline_mode = #tpu.pipeline_mode<synchronous>, transform_indices = @transform_1, window_bounds = array<i64: 32, 128>}, {pipeline_mode = #tpu.pipeline_mode<synchronous>, transform_indices = @transform_2, window_bounds = array<i64: 1, 128>}, {pipeline_mode = #tpu.pipeline_mode<synchronous>, transform_indices = @transform_3, window_bounds = array<i64: 128, 128>}, {pipeline_mode = #tpu.pipeline_mode<synchronous>, transform_indices = @transform_4, window_bounds = array<i64: 1, 128>}, {pipeline_mode = #tpu.pipeline_mode<synchronous>, transform_indices = @transform_5, window_bounds = array<i64: 128, 32>}, {pipeline_mode = #tpu.pipeline_mode<synchronous>, transform_indices = @transform_6, window_bounds = array<i64: 1, 32>}, {transform_indices = @transform_7, window_bounds = array<i64: 128, 32>}]} {
    %c0 = arith.constant 0 : index
    %c0_0 = arith.constant 0 : index
    %0 = vector.load %arg1[%c0, %c0_0] : memref<128x32xf32, #tpu.memory_space<vmem>>, vector<128x32xf32>
    %1 = arith.truncf %0 : vector<128x32xf32> to vector<128x32xbf16>
    %c0_1 = arith.constant 0 : index
    %c0_2 = arith.constant 0 : index
    %2 = vector.load %arg2[%c0_1, %c0_2] : memref<32x128xbf16, #tpu.memory_space<vmem>>, vector<32x128xbf16>
    %cst = arith.constant dense<0.000000e+00> : vector<128x128xf32>
    %3 = tpu.matmul %1, %2, %cst {dimension_numbers = #tpu.dot_dimension_numbers<[1], [0], [0], [1], [0, 0, 1, 1], [], []>} : vector<128x32xbf16>, vector<32x128xbf16>, vector<128x128xf32> -> vector<128x128xf32>
    %c0_3 = arith.constant 0 : index
    %c0_4 = arith.constant 0 : index
    %4 = vector.load %arg3[%c0_3, %c0_4] : memref<1x128xf32, #tpu.memory_space<vmem>>, vector<1x128xf32>
    %5 = vector.broadcast %4 : vector<1x128xf32> to vector<128x128xf32>
    %6 = arith.addf %3, %5 : vector<128x128xf32>
    %cst_5 = arith.constant 0.000000e+00 : f32
    %7 = vector.broadcast %cst_5 : f32 to vector<128x128xf32>
    %8 = arith.maximumf %6, %7 : vector<128x128xf32>
    %9 = arith.truncf %8 : vector<128x128xf32> to vector<128x128xbf16>
    %c0_6 = arith.constant 0 : index
    %c0_7 = arith.constant 0 : index
    %10 = vector.load %arg4[%c0_6, %c0_7] : memref<128x128xbf16, #tpu.memory_space<vmem>>, vector<128x128xbf16>
    %cst_8 = arith.constant dense<0.000000e+00> : vector<128x128xf32>
    %11 = tpu.matmul %9, %10, %cst_8 {dimension_numbers = #tpu.dot_dimension_numbers<[1], [0], [0], [1], [0, 0, 1, 1], [], []>} : vector<128x128xbf16>, vector<128x128xbf16>, vector<128x128xf32> -> vector<128x128xf32>
    %c0_9 = arith.constant 0 : index
    %c0_10 = arith.constant 0 : index
    %12 = vector.load %arg5[%c0_9, %c0_10] : memref<1x128xf32, #tpu.memory_space<vmem>>, vector<1x128xf32>
    %13 = vector.broadcast %12 : vector<1x128xf32> to vector<128x128xf32>
    %14 = arith.addf %11, %13 : vector<128x128xf32>
    %cst_11 = arith.constant 0.000000e+00 : f32
    %15 = vector.broadcast %cst_11 : f32 to vector<128x128xf32>
    %16 = arith.maximumf %14, %15 : vector<128x128xf32>
    %17 = arith.truncf %16 : vector<128x128xf32> to vector<128x128xbf16>
    %c0_12 = arith.constant 0 : index
    %c0_13 = arith.constant 0 : index
    %18 = vector.load %arg6[%c0_12, %c0_13] : memref<128x32xbf16, #tpu.memory_space<vmem>>, vector<128x32xbf16>
    %cst_14 = arith.constant dense<0.000000e+00> : vector<128x32xf32>
    %19 = tpu.matmul %17, %18, %cst_14 {dimension_numbers = #tpu.dot_dimension_numbers<[1], [0], [0], [1], [0, 0, 1, 1], [], []>} : vector<128x128xbf16>, vector<128x32xbf16>, vector<128x32xf32> -> vector<128x32xf32>
    %c0_15 = arith.constant 0 : index
    %c0_16 = arith.constant 0 : index
    %20 = vector.load %arg7[%c0_15, %c0_16] : memref<1x32xf32, #tpu.memory_space<vmem>>, vector<1x32xf32>
    %21 = vector.broadcast %20 : vector<1x32xf32> to vector<128x32xf32>
    %22 = arith.addf %19, %21 : vector<128x32xf32>
    %c0_17 = arith.constant 0 : index
    %c0_18 = arith.constant 0 : index
    %23 = vector.load %arg8[%c0_17, %c0_18] : memref<128x32xf32, #tpu.memory_space<vmem>>, vector<128x32xf32>
    tpu.vector_store %arg8[%c0_17, %c0_18], %22 {strides = array<i32>} : memref<128x32xf32, #tpu.memory_space<vmem>>, vector<128x32xf32>,
    return
  }
  func.func @transform_0(%arg0: i32) -> (i32, i32) {
    %c0_i32 = arith.constant 0 : i32
    %c0_i32_0 = arith.constant 0 : i32
    return %arg0, %c0_i32 : i32, i32
  }
  func.func @transform_1(%arg0: i32) -> (i32, i32) {
    %c0_i32 = arith.constant 0 : i32
    %c0_i32_0 = arith.constant 0 : i32
    %c0_i32_1 = arith.constant 0 : i32
    return %c0_i32, %c0_i32_0 : i32, i32
  }
  func.func @transform_2(%arg0: i32) -> (i32, i32) {
    %c0_i32 = arith.constant 0 : i32
    %c0_i32_0 = arith.constant 0 : i32
    %c0_i32_1 = arith.constant 0 : i32
    return %c0_i32, %c0_i32_0 : i32, i32
  }
  func.func @transform_3(%arg0: i32) -> (i32, i32) {
    %c0_i32 = arith.constant 0 : i32
    %c0_i32_0 = arith.constant 0 : i32
    %c0_i32_1 = arith.constant 0 : i32
    return %c0_i32, %c0_i32_0 : i32, i32
  }
  func.func @transform_4(%arg0: i32) -> (i32, i32) {
    %c0_i32 = arith.constant 0 : i32
    %c0_i32_0 = arith.constant 0 : i32
    %c0_i32_1 = arith.constant 0 : i32
    return %c0_i32, %c0_i32_0 : i32, i32
  }
  func.func @transform_5(%arg0: i32) -> (i32, i32) {
    %c0_i32 = arith.constant 0 : i32
    %c0_i32_0 = arith.constant 0 : i32
    %c0_i32_1 = arith.constant 0 : i32
    return %c0_i32, %c0_i32_0 : i32, i32
  }
  func.func @transform_6(%arg0: i32) -> (i32, i32) {
    %c0_i32 = arith.constant 0 : i32
    %c0_i32_0 = arith.constant 0 : i32
    %c0_i32_1 = arith.constant 0 : i32
    return %c0_i32, %c0_i32_0 : i32, i32
  }
  func.func @transform_7(%arg0: i32) -> (i32, i32) {
    %c0_i32 = arith.constant 0 : i32
    %c0_i32_0 = arith.constant 0 : i32
    return %arg0, %c0_i32 : i32, i32
  }
}

</mosaic_0001>

<llo_original>
// kernel: nnet_forward.1
$region0: #{nnet_forward.1}
  #allocation0 [shape = 'u32[]', space=smem, size = 0x4, offset = 0x4, fixed_abs, tag = 'smem constant byte address 0x4 - core index']
  #allocation1 [shape = 'u32[144,128]{1,0:T(1,128)}', space=vmem, size = 0x12000, scoped, tag = 'internal scratch']
  %s0 = inlined_call_operand.vmem [shape: f32[128,32], index: 0, kind: input, shape index: {}]
  %s1 = inlined_call_operand.vmem [shape: bf16[32,128], index: 1, kind: input, shape index: {}]
  %s2 = inlined_call_operand.vmem [shape: f32[1,128], index: 2, kind: input, shape index: {}]
  %s3 = inlined_call_operand.vmem [shape: bf16[128,128], index: 3, kind: input, shape index: {}]
  %s4 = inlined_call_operand.vmem [shape: f32[1,128], index: 4, kind: input, shape index: {}]
  %s5 = inlined_call_operand.vmem [shape: bf16[128,32], index: 5, kind: input, shape index: {}]
  %s6 = inlined_call_operand.vmem [shape: f32[1,32], index: 6, kind: input, shape index: {}]
  %s7 = inlined_call_operand.vmem [shape: f32[128,32], index: 7, kind: output, shape index: {}]
  %s8 = sld [smem:[#allocation0]]
  $region38: #{nnet_forward.1} parent=0
    _
  %s10 = ssub.s32 1, %s8
  %s11 = scalar_select 0, %s10, %s8
  // Predicated region
  $region2: #{nnet_forward.1} parent=0 // pred_check
    _
  $region3: #{nnet_forward.1} parent=0 // pred_check_branch
    %13 = sbr.rel (0) target = $region5
  $region4: #{nnet_forward.1} parent=0 // pred_region
    _
  $region5: #{nnet_forward.1} parent=0 // pred_fallthru
    _
  // Predicated region
  $region6: #{nnet_forward.1} parent=0 // pred_check
    _
  $region7: #{nnet_forward.1} parent=0 // pred_check_branch
    %15 = sbr.rel (0) target = $region9
  $region8: #{nnet_forward.1} parent=0 // pred_region
    _
  $region9: #{nnet_forward.1} parent=0 // pred_fallthru
    _
  // Predicated region
  $region10: #{nnet_forward.1} parent=0 // pred_check
    _
  $region11: #{nnet_forward.1} parent=0 // pred_check_branch
    %17 = sbr.rel (0) target = $region13
  $region12: #{nnet_forward.1} parent=0 // pred_region
    _
  $region13: #{nnet_forward.1} parent=0 // pred_fallthru
    _
  // Predicated region
  $region14: #{nnet_forward.1} parent=0 // pred_check
    _
  $region15: #{nnet_forward.1} parent=0 // pred_check_branch
    %19 = sbr.rel (0) target = $region17
  $region16: #{nnet_forward.1} parent=0 // pred_region
    _
  $region17: #{nnet_forward.1} parent=0 // pred_fallthru
    _
  // Predicated region
  $region18: #{nnet_forward.1} parent=0 // pred_check
    _
  $region19: #{nnet_forward.1} parent=0 // pred_check_branch
    %21 = sbr.rel (0) target = $region21
  $region20: #{nnet_forward.1} parent=0 // pred_region
    _
  $region21: #{nnet_forward.1} parent=0 // pred_fallthru
    _
  // Predicated region
  $region22: #{nnet_forward.1} parent=0 // pred_check
    _
  $region23: #{nnet_forward.1} parent=0 // pred_check_branch
    %23 = sbr.rel (0) target = $region25
  $region24: #{nnet_forward.1} parent=0 // pred_region
    _
  $region25: #{nnet_forward.1} parent=0 // pred_fallthru
    _
  // Predicated region
  $region26: #{nnet_forward.1} parent=0 // pred_check
    _
  $region27: #{nnet_forward.1} parent=0 // pred_check_branch
    %25 = sbr.rel (0) target = $region29
  $region28: #{nnet_forward.1} parent=0 // pred_region
    _
  $region29: #{nnet_forward.1} parent=0 // pred_fallthru
    _
  %v27 = vld [vmem:[%s0] sm:$0xff]
  %v28 = vld [vmem:[%s0 + $0x8] sm:$0xff]
  %v29 = vld [vmem:[%s0 + $0x10] sm:$0xff]
  %v30 = vld [vmem:[%s0 + $0x18] sm:$0xff]
  %v31 = vld [vmem:[%s0 + $0x20] sm:$0xff]
  %v32 = vld [vmem:[%s0 + $0x28] sm:$0xff]
  %v33 = vld [vmem:[%s0 + $0x30] sm:$0xff]
  %v34 = vld [vmem:[%s0 + $0x38] sm:$0xff]
  %v35 = vld [vmem:[%s0 + $0x40] sm:$0xff]
  %v36 = vld [vmem:[%s0 + $0x48] sm:$0xff]
  %v37 = vld [vmem:[%s0 + $0x50] sm:$0xff]
  %v38 = vld [vmem:[%s0 + $0x58] sm:$0xff]
  %v39 = vld [vmem:[%s0 + $0x60] sm:$0xff]
  %v40 = vld [vmem:[%s0 + $0x68] sm:$0xff]
  %v41 = vld [vmem:[%s0 + $0x70] sm:$0xff]
  %v42 = vld [vmem:[%s0 + $0x78] sm:$0xff]
  %v43 = vpack.c.bf16 %v28, %v27
  %v44 = vpack.c.bf16 %v30, %v29
  %v45 = vpack.c.bf16 %v32, %v31
  %v46 = vpack.c.bf16 %v34, %v33
  %v47 = vpack.c.bf16 %v36, %v35
  %v48 = vpack.c.bf16 %v38, %v37
  %v49 = vpack.c.bf16 %v40, %v39
  %v50 = vpack.c.bf16 %v42, %v41
  %v51 = vld [vmem:[%s1] sm:$0xf]
  %v52 = vld [vmem:[%s1 + $0x4] sm:$0xf]
  %v53 = vld [vmem:[%s1 + $0x8] sm:$0xf]
  %v54 = vld [vmem:[%s1 + $0xc] sm:$0xf]
  %v55 = vld [vmem:[%s2] sm:$0x1]
  %v57 = vlaneseq
  %v58 = vshrl.u32 %v57, 7
  %v59 = vsub.s32 0, %v58
  %v60 = vrot.slane %v55, %v59
  %v66 = vunpack.c.l.b16 %v51
  %v67 = vunpack.c.l.b16 %v52
  %v68 = vunpack.c.l.b16 %v53
  %v69 = vunpack.c.l.b16 %v54
  %v70 = vpack.c.b16 %v67, %v66
  %v71 = vpack.c.b16 %v69, %v68
  %vm74 = vcmask 261120
  %v76 = vsel %vm74, %v43, 0
  %v79 = vsel %vm74, %v44, 0
  %v82 = vsel %vm74, %v45, 0
  %v85 = vsel %vm74, %v46, 0
  %v88 = vsel %vm74, %v47, 0
  %v91 = vsel %vm74, %v48, 0
  %v94 = vsel %vm74, %v49, 0
  %v97 = vsel %vm74, %v50, 0
  %99 = vmatprep.subr.bf16.mxu0 0
  %100 = vmatpush1.bf16.msra.mxu0 %v70
  %101 = vmatprep.subr.bf16.mxu0 0
  %102 = vmatpush1.bf16.msra.mxu0 %v71
  %103 = vmatprep.subr.bf16.mxu0 0
  %104 = vmatpush1.bf16.msra.mxu0 0
  %105 = vmatprep.subr.bf16.mxu0 0
  %106 = vmatpush1.bf16.msra.mxu0 0
  %107 = vmatprep.subr.bf16.mxu0 0
  %108 = vmatpush1.bf16.msra.mxu0 0
  %109 = vmatprep.subr.bf16.mxu0 0
  %110 = vmatpush1.bf16.msra.mxu0 0
  %111 = vmatprep.subr.bf16.mxu0 0
  %112 = vmatpush1.bf16.msra.mxu0 0
  %113 = vmatprep.subr.bf16.mxu0 0
  %114 = vmatpush1.bf16.msra.mxu0 0
  %115 = vmatprep.subr.bf16.mxu0 0
  %116 = vmatpush1.bf16.msra.mxu0 0
  %117 = vmatprep.subr.bf16.mxu0 0
  %118 = vmatpush1.bf16.msra.mxu0 0
  %119 = vmatprep.subr.bf16.mxu0 0
  %120 = vmatpush1.bf16.msra.mxu0 0
  %121 = vmatprep.subr.bf16.mxu0 0
  %122 = vmatpush1.bf16.msra.mxu0 0
  %123 = vmatprep.subr.bf16.mxu0 0
  %124 = vmatpush1.bf16.msra.mxu0 0
  %125 = vmatprep.subr.bf16.mxu0 0
  %126 = vmatpush1.bf16.msra.mxu0 0
  %127 = vmatprep.subr.bf16.mxu0 0
  %128 = vmatpush1.bf16.msra.mxu0 0
  %129 = vmatprep.subr.bf16.mxu0 0
  %130 = vmatpush1.bf16.msra.mxu0 0
  %131 = vmatprep.mubr.bf16.mxu0 0
  %132 = vmatmul.mubr.bf16.gmra.mrb[0].mxu0 %v76
  %v133 = vpop.f32.mrb[0].mxu0
  %v134 = vadd.f32 %v60, %v133
  %v135 = vpop.f32.mrb[0].mxu0
  %v136 = vpop.f32.mrb[0].mxu0
  %v137 = vadd.f32 %v60, %v136
  %v138 = vpop.f32.mrb[0].mxu0
  %139 = vmatprep.mubr.bf16.mxu0 0
  %140 = vmatmul.mubr.bf16.gmra.mrb[0].mxu0 %v79
  %v141 = vpop.f32.mrb[0].mxu0
  %v142 = vadd.f32 %v60, %v141
  %v143 = vpop.f32.mrb[0].mxu0
  %v144 = vpop.f32.mrb[0].mxu0
  %v145 = vadd.f32 %v60, %v144
  %v146 = vpop.f32.mrb[0].mxu0
  %147 = vmatprep.mubr.bf16.mxu0 0
  %148 = vmatmul.mubr.bf16.gmra.mrb[0].mxu0 %v82
  %v149 = vpop.f32.mrb[0].mxu0
  %v150 = vadd.f32 %v60, %v149
  %v151 = vpop.f32.mrb[0].mxu0
  %v152 = vpop.f32.mrb[0].mxu0
  %v153 = vadd.f32 %v60, %v152
  %v154 = vpop.f32.mrb[0].mxu0
  %155 = vmatprep.mubr.bf16.mxu0 0
  %156 = vmatmul.mubr.bf16.gmra.mrb[0].mxu0 %v85
  %v157 = vpop.f32.mrb[0].mxu0
  %v158 = vadd.f32 %v60, %v157
  %v159 = vpop.f32.mrb[0].mxu0
  %v160 = vpop.f32.mrb[0].mxu0
  %v161 = vadd.f32 %v60, %v160
  %v162 = vpop.f32.mrb[0].mxu0
  %163 = vmatprep.mubr.bf16.mxu0 0
  %164 = vmatmul.mubr.bf16.gmra.mrb[0].mxu0 %v88
  %v165 = vpop.f32.mrb[0].mxu0
  %v166 = vadd.f32 %v60, %v165
  %v167 = vpop.f32.mrb[0].mxu0
  %v168 = vpop.f32.mrb[0].mxu0
  %v169 = vadd.f32 %v60, %v168
  %v170 = vpop.f32.mrb[0].mxu0
  %171 = vmatprep.mubr.bf16.mxu0 0
  %172 = vmatmul.mubr.bf16.gmra.mrb[0].mxu0 %v91
  %v173 = vpop.f32.mrb[0].mxu0
  %v174 = vadd.f32 %v60, %v173
  %v175 = vpop.f32.mrb[0].mxu0
  %v176 = vpop.f32.mrb[0].mxu0
  %v177 = vadd.f32 %v60, %v176
  %v178 = vpop.f32.mrb[0].mxu0
  %179 = vmatprep.mubr.bf16.mxu0 0
  %180 = vmatmul.mubr.bf16.gmra.mrb[0].mxu0 %v94
  %v181 = vpop.f32.mrb[0].mxu0
  %v182 = vadd.f32 %v60, %v181
  %v183 = vpop.f32.mrb[0].mxu0
  %v184 = vpop.f32.mrb[0].mxu0
  %v185 = vadd.f32 %v60, %v184
  %v186 = vpop.f32.mrb[0].mxu0
  %187 = vmatprep.mubr.bf16.mxu0 0
  %188 = vmatmul.mubr.bf16.gmra.mrb[0].mxu0 %v97
  %v189 = vpop.f32.mrb[0].mxu0
  %v190 = vadd.f32 %v60, %v189
  %v191 = vpop.f32.mrb[0].mxu0
  %v192 = vpop.f32.mrb[0].mxu0
  %v193 = vadd.f32 %v60, %v192
  %v194 = vpop.f32.mrb[0].mxu0
  %195 = vdwg.mxu0
  %v196 = vmax.f32 %v134, 0.0
  %v197 = vmax.f32 %v137, 0.0
  %v198 = vmax.f32 %v142, 0.0
  %v199 = vmax.f32 %v145, 0.0
  %v200 = vmax.f32 %v150, 0.0
  %v201 = vmax.f32 %v153, 0.0
  %v202 = vmax.f32 %v158, 0.0
  %v203 = vmax.f32 %v161, 0.0
  %v204 = vmax.f32 %v166, 0.0
  %v205 = vmax.f32 %v169, 0.0
  %v206 = vmax.f32 %v174, 0.0
  %v207 = vmax.f32 %v177, 0.0
  %v208 = vmax.f32 %v182, 0.0
  %v209 = vmax.f32 %v185, 0.0
  %v210 = vmax.f32 %v190, 0.0
  %v211 = vmax.f32 %v193, 0.0
  %v212 = vpack.c.bf16 %v197, %v196
  %v213 = vpack.c.bf16 %v199, %v198
  %v214 = vpack.c.bf16 %v201, %v200
  %v215 = vpack.c.bf16 %v203, %v202
  %v216 = vpack.c.bf16 %v205, %v204
  %v217 = vpack.c.bf16 %v207, %v206
  %v218 = vpack.c.bf16 %v209, %v208
  %v219 = vpack.c.bf16 %v211, %v210
  %v220 = vld [vmem:[%s3] sm:$0xf]
  %v221 = vld [vmem:[%s3 + $0x4] sm:$0xf]
  %v222 = vld [vmem:[%s3 + $0x8] sm:$0xf]
  %v223 = vld [vmem:[%s3 + $0xc] sm:$0xf]
  %v224 = vld [vmem:[%s3 + $0x10] sm:$0xf]
  %v225 = vld [vmem:[%s3 + $0x14] sm:$0xf]
  %v226 = vld [vmem:[%s3 + $0x18] sm:$0xf]
  %v227 = vld [vmem:[%s3 + $0x1c] sm:$0xf]
  %v228 = vld [vmem:[%s3 + $0x20] sm:$0xf]
  %v229 = vld [vmem:[%s3 + $0x24] sm:$0xf]
  %v230 = vld [vmem:[%s3 + $0x28] sm:$0xf]
  %v231 = vld [vmem:[%s3 + $0x2c] sm:$0xf]
  %v232 = vld [vmem:[%s3 + $0x30] sm:$0xf]
  %v233 = vld [vmem:[%s3 + $0x34] sm:$0xf]
  %v234 = vld [vmem:[%s3 + $0x38] sm:$0xf]
  %v235 = vld [vmem:[%s3 + $0x3c] sm:$0xf]
  %v236 = vld [vmem:[%s4] sm:$0x1]
  %v238 = vlaneseq
  %v239 = vshrl.u32 %v238, 7
  %v240 = vsub.s32 0, %v239
  %v241 = vrot.slane %v236, %v240
  %v259 = vunpack.c.l.b16 %v220
  %v260 = vunpack.c.l.b16 %v221
  %v261 = vunpack.c.l.b16 %v222
  %v262 = vunpack.c.l.b16 %v223
  %v263 = vunpack.c.l.b16 %v224
  %v264 = vunpack.c.l.b16 %v225
  %v265 = vunpack.c.l.b16 %v226
  %v266 = vunpack.c.l.b16 %v227
  %v267 = vunpack.c.l.b16 %v228
  %v268 = vunpack.c.l.b16 %v229
  %v269 = vunpack.c.l.b16 %v230
  %v270 = vunpack.c.l.b16 %v231
  %v271 = vunpack.c.l.b16 %v232
  %v272 = vunpack.c.l.b16 %v233
  %v273 = vunpack.c.l.b16 %v234
  %v274 = vunpack.c.l.b16 %v235
  %v275 = vpack.c.b16 %v260, %v259
  %v276 = vpack.c.b16 %v262, %v261
  %v277 = vpack.c.b16 %v264, %v263
  %v278 = vpack.c.b16 %v266, %v265
  %v279 = vpack.c.b16 %v268, %v267
  %v280 = vpack.c.b16 %v270, %v269
  %v281 = vpack.c.b16 %v272, %v271
  %v282 = vpack.c.b16 %v274, %v273
  %291 = vmatprep.subr.bf16.mxu0 0
  %292 = vmatpush1.bf16.msra.mxu0 %v275
  %293 = vmatprep.subr.bf16.mxu0 0
  %294 = vmatpush1.bf16.msra.mxu0 %v276
  %295 = vmatprep.subr.bf16.mxu0 0
  %296 = vmatpush1.bf16.msra.mxu0 %v277
  %297 = vmatprep.subr.bf16.mxu0 0
  %298 = vmatpush1.bf16.msra.mxu0 %v278
  %299 = vmatprep.subr.bf16.mxu0 0
  %300 = vmatpush1.bf16.msra.mxu0 %v279
  %301 = vmatprep.subr.bf16.mxu0 0
  %302 = vmatpush1.bf16.msra.mxu0 %v280
  %303 = vmatprep.subr.bf16.mxu0 0
  %304 = vmatpush1.bf16.msra.mxu0 %v281
  %305 = vmatprep.subr.bf16.mxu0 0
  %306 = vmatpush1.bf16.msra.mxu0 %v282
  %307 = vmatprep.subr.bf16.mxu0 0
  %308 = vmatpush1.bf16.msra.mxu0 0
  %309 = vmatprep.subr.bf16.mxu0 0
  %310 = vmatpush1.bf16.msra.mxu0 0
  %311 = vmatprep.subr.bf16.mxu0 0
  %312 = vmatpush1.bf16.msra.mxu0 0
  %313 = vmatprep.subr.bf16.mxu0 0
  %314 = vmatpush1.bf16.msra.mxu0 0
  %315 = vmatprep.subr.bf16.mxu0 0
  %316 = vmatpush1.bf16.msra.mxu0 0
  %317 = vmatprep.subr.bf16.mxu0 0
  %318 = vmatpush1.bf16.msra.mxu0 0
  %319 = vmatprep.subr.bf16.mxu0 0
  %320 = vmatpush1.bf16.msra.mxu0 0
  %321 = vmatprep.subr.bf16.mxu0 0
  %322 = vmatpush1.bf16.msra.mxu0 0
  %323 = vmatprep.mubr.bf16.mxu0 0
  %324 = vmatmul.mubr.bf16.gmra.mrb[0].mxu0 %v212
  %v325 = vpop.f32.mrb[0].mxu0
  %v326 = vadd.f32 %v241, %v325
  %v327 = vpop.f32.mrb[0].mxu0
  %v328 = vpop.f32.mrb[0].mxu0
  %v329 = vadd.f32 %v241, %v328
  %v330 = vpop.f32.mrb[0].mxu0
  %331 = vmatprep.mubr.bf16.mxu0 0
  %332 = vmatmul.mubr.bf16.gmra.mrb[0].mxu0 %v213
  %v333 = vpop.f32.mrb[0].mxu0
  %v334 = vadd.f32 %v241, %v333
  %v335 = vpop.f32.mrb[0].mxu0
  %v336 = vpop.f32.mrb[0].mxu0
  %v337 = vadd.f32 %v241, %v336
  %v338 = vpop.f32.mrb[0].mxu0
  %339 = vmatprep.mubr.bf16.mxu0 0
  %340 = vmatmul.mubr.bf16.gmra.mrb[0].mxu0 %v214
  %v341 = vpop.f32.mrb[0].mxu0
  %v342 = vadd.f32 %v241, %v341
  %v343 = vpop.f32.mrb[0].mxu0
  %v344 = vpop.f32.mrb[0].mxu0
  %v345 = vadd.f32 %v241, %v344
  %v346 = vpop.f32.mrb[0].mxu0
  %347 = vmatprep.mubr.bf16.mxu0 0
  %348 = vmatmul.mubr.bf16.gmra.mrb[0].mxu0 %v215
  %v349 = vpop.f32.mrb[0].mxu0
  %v350 = vadd.f32 %v241, %v349
  %v351 = vpop.f32.mrb[0].mxu0
  %v352 = vpop.f32.mrb[0].mxu0
  %v353 = vadd.f32 %v241, %v352
  %v354 = vpop.f32.mrb[0].mxu0
  %355 = vmatprep.mubr.bf16.mxu0 0
  %356 = vmatmul.mubr.bf16.gmra.mrb[0].mxu0 %v216
  %v357 = vpop.f32.mrb[0].mxu0
  %v358 = vadd.f32 %v241, %v357
  %v359 = vpop.f32.mrb[0].mxu0
  %v360 = vpop.f32.mrb[0].mxu0
  %v361 = vadd.f32 %v241, %v360
  %v362 = vpop.f32.mrb[0].mxu0
  %363 = vmatprep.mubr.bf16.mxu0 0
  %364 = vmatmul.mubr.bf16.gmra.mrb[0].mxu0 %v217
  %v365 = vpop.f32.mrb[0].mxu0
  %v366 = vadd.f32 %v241, %v365
  %v367 = vpop.f32.mrb[0].mxu0
  %v368 = vpop.f32.mrb[0].mxu0
  %v369 = vadd.f32 %v241, %v368
  %v370 = vpop.f32.mrb[0].mxu0
  %371 = vmatprep.mubr.bf16.mxu0 0
  %372 = vmatmul.mubr.bf16.gmra.mrb[0].mxu0 %v218
  %v373 = vpop.f32.mrb[0].mxu0
  %v374 = vadd.f32 %v241, %v373
  %v375 = vpop.f32.mrb[0].mxu0
  %v376 = vpop.f32.mrb[0].mxu0
  %v377 = vadd.f32 %v241, %v376
  %v378 = vpop.f32.mrb[0].mxu0
  %379 = vmatprep.mubr.bf16.mxu0 0
  %380 = vmatmul.mubr.bf16.gmra.mrb[0].mxu0 %v219
  %v381 = vpop.f32.mrb[0].mxu0
  %v382 = vadd.f32 %v241, %v381
  %v383 = vpop.f32.mrb[0].mxu0
  %v384 = vpop.f32.mrb[0].mxu0
  %v385 = vadd.f32 %v241, %v384
  %v386 = vpop.f32.mrb[0].mxu0
  %387 = vdwg.mxu0
  %v388 = vmax.f32 %v326, 0.0
  %v389 = vmax.f32 %v329, 0.0
  %v390 = vmax.f32 %v334, 0.0
  %v391 = vmax.f32 %v337, 0.0
  %v392 = vmax.f32 %v342, 0.0
  %v393 = vmax.f32 %v345, 0.0
  %v394 = vmax.f32 %v350, 0.0
  %v395 = vmax.f32 %v353, 0.0
  %v396 = vmax.f32 %v358, 0.0
  %v397 = vmax.f32 %v361, 0.0
  %v398 = vmax.f32 %v366, 0.0
  %v399 = vmax.f32 %v369, 0.0
  %v400 = vmax.f32 %v374, 0.0
  %v401 = vmax.f32 %v377, 0.0
  %v402 = vmax.f32 %v382, 0.0
  %v403 = vmax.f32 %v385, 0.0
  %v404 = vpack.c.bf16 %v389, %v388
  %v405 = vpack.c.bf16 %v391, %v390
  %v406 = vpack.c.bf16 %v393, %v392
  %v407 = vpack.c.bf16 %v395, %v394
  %v408 = vpack.c.bf16 %v397, %v396
  %v409 = vpack.c.bf16 %v399, %v398
  %v410 = vpack.c.bf16 %v401, %v400
  %v411 = vpack.c.bf16 %v403, %v402
  %v412 = vld [vmem:[%s5] sm:$0xf]
  %v413 = vld [vmem:[%s5 + $0x4] sm:$0xf]
  %v414 = vld [vmem:[%s5 + $0x8] sm:$0xf]
  %v415 = vld [vmem:[%s5 + $0xc] sm:$0xf]
  %v416 = vld [vmem:[%s5 + $0x10] sm:$0xf]
  %v417 = vld [vmem:[%s5 + $0x14] sm:$0xf]
  %v418 = vld [vmem:[%s5 + $0x18] sm:$0xf]
  %v419 = vld [vmem:[%s5 + $0x1c] sm:$0xf]
  %v420 = vld [vmem:[%s5 + $0x20] sm:$0xf]
  %v421 = vld [vmem:[%s5 + $0x24] sm:$0xf]
  %v422 = vld [vmem:[%s5 + $0x28] sm:$0xf]
  %v423 = vld [vmem:[%s5 + $0x2c] sm:$0xf]
  %v424 = vld [vmem:[%s5 + $0x30] sm:$0xf]
  %v425 = vld [vmem:[%s5 + $0x34] sm:$0xf]
  %v426 = vld [vmem:[%s5 + $0x38] sm:$0xf]
  %v427 = vld [vmem:[%s5 + $0x3c] sm:$0xf]
  %v428 = vld [vmem:[%s6] sm:$0x1]
  %v430 = vlaneseq
  %v431 = vshrl.u32 %v430, 7
  %v432 = vsub.s32 0, %v431
  %v433 = vrot.slane %v428, %v432
  %v451 = vunpack.c.l.b16 %v412
  %v452 = vunpack.c.l.b16 %v413
  %v453 = vunpack.c.l.b16 %v414
  %v454 = vunpack.c.l.b16 %v415
  %v455 = vunpack.c.l.b16 %v416
  %v456 = vunpack.c.l.b16 %v417
  %v457 = vunpack.c.l.b16 %v418
  %v458 = vunpack.c.l.b16 %v419
  %v459 = vunpack.c.l.b16 %v420
  %v460 = vunpack.c.l.b16 %v421
  %v461 = vunpack.c.l.b16 %v422
  %v462 = vunpack.c.l.b16 %v423
  %v463 = vunpack.c.l.b16 %v424
  %v464 = vunpack.c.l.b16 %v425
  %v465 = vunpack.c.l.b16 %v426
  %v466 = vunpack.c.l.b16 %v427
  %v467 = vpack.c.b16 %v452, %v451
  %v468 = vpack.c.b16 %v454, %v453
  %v469 = vpack.c.b16 %v456, %v455
  %v470 = vpack.c.b16 %v458, %v457
  %v471 = vpack.c.b16 %v460, %v459
  %v472 = vpack.c.b16 %v462, %v461
  %v473 = vpack.c.b16 %v464, %v463
  %v474 = vpack.c.b16 %v466, %v465
  %483 = vmatprep.subr.bf16.mxu0 0
  %484 = vmatpush1.bf16.msra.mxu0 %v467
  %485 = vmatprep.subr.bf16.mxu0 0
  %486 = vmatpush1.bf16.msra.mxu0 %v468
  %487 = vmatprep.subr.bf16.mxu0 0
  %488 = vmatpush1.bf16.msra.mxu0 %v469
  %489 = vmatprep.subr.bf16.mxu0 0
  %490 = vmatpush1.bf16.msra.mxu0 %v470
  %491 = vmatprep.subr.bf16.mxu0 0
  %492 = vmatpush1.bf16.msra.mxu0 %v471
  %493 = vmatprep.subr.bf16.mxu0 0
  %494 = vmatpush1.bf16.msra.mxu0 %v472
  %495 = vmatprep.subr.bf16.mxu0 0
  %496 = vmatpush1.bf16.msra.mxu0 %v473
  %497 = vmatprep.subr.bf16.mxu0 0
  %498 = vmatpush1.bf16.msra.mxu0 %v474
  %499 = vmatprep.subr.bf16.mxu0 0
  %500 = vmatpush1.bf16.msra.mxu0 0
  %501 = vmatprep.subr.bf16.mxu0 0
  %502 = vmatpush1.bf16.msra.mxu0 0
  %503 = vmatprep.subr.bf16.mxu0 0
  %504 = vmatpush1.bf16.msra.mxu0 0
  %505 = vmatprep.subr.bf16.mxu0 0
  %506 = vmatpush1.bf16.msra.mxu0 0
  %507 = vmatprep.subr.bf16.mxu0 0
  %508 = vmatpush1.bf16.msra.mxu0 0
  %509 = vmatprep.subr.bf16.mxu0 0
  %510 = vmatpush1.bf16.msra.mxu0 0
  %511 = vmatprep.subr.bf16.mxu0 0
  %512 = vmatpush1.bf16.msra.mxu0 0
  %513 = vmatprep.subr.bf16.mxu0 0
  %514 = vmatpush1.bf16.msra.mxu0 0
  %515 = vmatprep.mubr.bf16.mxu0 0
  %516 = vmatmul.mubr.bf16.gmra.mrb[0].mxu0 %v404
  %v517 = vpop.f32.mrb[0].mxu0
  %v518 = vadd.f32 %v433, %v517
  %v519 = vpop.f32.mrb[0].mxu0
  %v520 = vpop.f32.mrb[0].mxu0
  %v521 = vadd.f32 %v433, %v520
  %v522 = vpop.f32.mrb[0].mxu0
  %523 = vmatprep.mubr.bf16.mxu0 0
  %524 = vmatmul.mubr.bf16.gmra.mrb[0].mxu0 %v405
  %v525 = vpop.f32.mrb[0].mxu0
  %v526 = vadd.f32 %v433, %v525
  %v527 = vpop.f32.mrb[0].mxu0
  %v528 = vpop.f32.mrb[0].mxu0
  %v529 = vadd.f32 %v433, %v528
  %v530 = vpop.f32.mrb[0].mxu0
  %531 = vmatprep.mubr.bf16.mxu0 0
  %532 = vmatmul.mubr.bf16.gmra.mrb[0].mxu0 %v406
  %v533 = vpop.f32.mrb[0].mxu0
  %v534 = vadd.f32 %v433, %v533
  %v535 = vpop.f32.mrb[0].mxu0
  %v536 = vpop.f32.mrb[0].mxu0
  %v537 = vadd.f32 %v433, %v536
  %v538 = vpop.f32.mrb[0].mxu0
  %539 = vmatprep.mubr.bf16.mxu0 0
  %540 = vmatmul.mubr.bf16.gmra.mrb[0].mxu0 %v407
  %v541 = vpop.f32.mrb[0].mxu0
  %v542 = vadd.f32 %v433, %v541
  %v543 = vpop.f32.mrb[0].mxu0
  %v544 = vpop.f32.mrb[0].mxu0
  %v545 = vadd.f32 %v433, %v544
  %v546 = vpop.f32.mrb[0].mxu0
  %547 = vmatprep.mubr.bf16.mxu0 0
  %548 = vmatmul.mubr.bf16.gmra.mrb[0].mxu0 %v408
  %v549 = vpop.f32.mrb[0].mxu0
  %v550 = vadd.f32 %v433, %v549
  %v551 = vpop.f32.mrb[0].mxu0
  %v552 = vpop.f32.mrb[0].mxu0
  %v553 = vadd.f32 %v433, %v552
  %v554 = vpop.f32.mrb[0].mxu0
  %555 = vmatprep.mubr.bf16.mxu0 0
  %556 = vmatmul.mubr.bf16.gmra.mrb[0].mxu0 %v409
  %v557 = vpop.f32.mrb[0].mxu0
  %v558 = vadd.f32 %v433, %v557
  %v559 = vpop.f32.mrb[0].mxu0
  %v560 = vpop.f32.mrb[0].mxu0
  %v561 = vadd.f32 %v433, %v560
  %v562 = vpop.f32.mrb[0].mxu0
  %563 = vmatprep.mubr.bf16.mxu0 0
  %564 = vmatmul.mubr.bf16.gmra.mrb[0].mxu0 %v410
  %v565 = vpop.f32.mrb[0].mxu0
  %v566 = vadd.f32 %v433, %v565
  %v567 = vpop.f32.mrb[0].mxu0
  %v568 = vpop.f32.mrb[0].mxu0
  %v569 = vadd.f32 %v433, %v568
  %v570 = vpop.f32.mrb[0].mxu0
  %571 = vmatprep.mubr.bf16.mxu0 0
  %572 = vmatmul.mubr.bf16.gmra.mrb[0].mxu0 %v411
  %v573 = vpop.f32.mrb[0].mxu0
  %v574 = vadd.f32 %v433, %v573
  %v575 = vpop.f32.mrb[0].mxu0
  %v576 = vpop.f32.mrb[0].mxu0
  %v577 = vadd.f32 %v433, %v576
  %v578 = vpop.f32.mrb[0].mxu0
  %579 = vdwg.mxu0
  %580 = vst.msk [vmem:[%s7] sm:$0xff] %vm74, %v518
  %581 = vst.msk [vmem:[%s7 + $0x8] sm:$0xff] %vm74, %v521
  %582 = vst.msk [vmem:[%s7 + $0x10] sm:$0xff] %vm74, %v526
  %583 = vst.msk [vmem:[%s7 + $0x18] sm:$0xff] %vm74, %v529
  %584 = vst.msk [vmem:[%s7 + $0x20] sm:$0xff] %vm74, %v534
  %585 = vst.msk [vmem:[%s7 + $0x28] sm:$0xff] %vm74, %v537
  %586 = vst.msk [vmem:[%s7 + $0x30] sm:$0xff] %vm74, %v542
  %587 = vst.msk [vmem:[%s7 + $0x38] sm:$0xff] %vm74, %v545
  %588 = vst.msk [vmem:[%s7 + $0x40] sm:$0xff] %vm74, %v550
  %589 = vst.msk [vmem:[%s7 + $0x48] sm:$0xff] %vm74, %v553
  %590 = vst.msk [vmem:[%s7 + $0x50] sm:$0xff] %vm74, %v558
  %591 = vst.msk [vmem:[%s7 + $0x58] sm:$0xff] %vm74, %v561
  %592 = vst.msk [vmem:[%s7 + $0x60] sm:$0xff] %vm74, %v566
  %593 = vst.msk [vmem:[%s7 + $0x68] sm:$0xff] %vm74, %v569
  %594 = vst.msk [vmem:[%s7 + $0x70] sm:$0xff] %vm74, %v574
  %595 = vst.msk [vmem:[%s7 + $0x78] sm:$0xff] %vm74, %v577
  // Predicated region
  $region30: #{nnet_forward.1} parent=0 // pred_check
    _
  $region31: #{nnet_forward.1} parent=0 // pred_check_branch
    %597 = sbr.rel (0) target = $region33
  $region32: #{nnet_forward.1} parent=0 // pred_region
    _
  $region33: #{nnet_forward.1} parent=0 // pred_fallthru
    _
  // Predicated region
  $region34: #{nnet_forward.1} parent=0 // pred_check
    _
  $region35: #{nnet_forward.1} parent=0 // pred_check_branch
    %599 = sbr.rel (0) target = $region37
  $region36: #{nnet_forward.1} parent=0 // pred_region
    _
  $region37: #{nnet_forward.1} parent=0 // pred_fallthru
    _

</llo_original>
